<compile_context>
chip_gen: v5e
topology: v5e:2x2
jax: 0.10.0
libtpu: 0.0.40
codegen_flags: <defaults>
</compile_context>

<pallas_src>
import jax
import jax.numpy as jnp
from jax.experimental import pallas as pl
from jax.experimental.pallas import tpu as pltpu


def _interactor_pads(kernel_size, dilation=1):
    """Replication-pad widths used by Interactor.__init__."""
    if kernel_size % 2 == 0:
        pad_l = dilation * (kernel_size - 2) // 2 + 1
        pad_r = dilation * kernel_size // 2 + 1
    else:
        pad_l = dilation * (kernel_size - 1) // 2 + 1
        pad_r = dilation * (kernel_size - 1) // 2 + 1
    return pad_l, pad_r


def level_scinet_forward(x, w1_phi, b1_phi, w2_phi, b2_phi,
                         w1_psi, b1_psi, w2_psi, b2_psi, *, batch_tile=None):
    """x: (B, T, D).  Conv weights in PyTorch layout:
       w1: (H, D, K1), b1: (H,), w2: (D, H, K2), b2: (D,).
       Returns (x_even_update, x_odd_update), each (B, T//2, D)."""
    B, T, D = x.shape
    assert T % 2 == 0, "sequence length must be even for the even/odd split"
    Th = T // 2
    H, D1, K1 = w1_phi.shape
    D2, H2, K2 = w2_phi.shape
    assert D1 == D and D2 == D and H2 == H

    pad_l, pad_r = _interactor_pads(K1)
    Tp = Th + pad_l + pad_r                 # replication-padded length per batch
    L1 = Tp - K1 + 1                        # conv1 valid output length per batch
    assert L1 >= Th + K2 - 1                # conv2 can produce Th valid outputs

    tb = B if batch_tile is None else batch_tile
    assert B % tb == 0
    G = B // tb                             # grid steps (batch tiles)
    Wt = tb * Tp                            # lane width of an output tile
    Wh = Wt + (K2 - 1)                      # lane width of the hidden slab
    We = Wh + (K1 - 1)                      # lane width of the padded-input slab

    x_even = x[:, 0::2, :]                  # (B, Th, D)
    x_odd = x[:, 1::2, :]

    # ---- wrapper-side layout plumbing (pure reshapes/pads, done by XLA) ----
    def im2col_conv1(xs):
        # (B, Th, D) -> (G, K1*D + 1, Wh): replication-padded, batch folded
        # into the lane axis (Tp-wide segments), K1 shifted taps stacked on
        # rows, plus a ones row so the conv1 bias folds into the matmul.
        xc = jnp.transpose(xs, (0, 2, 1))                                # (B, D, Th)
        xp = jnp.pad(xc, ((0, 0), (0, 0), (pad_l, pad_r)), mode='edge')  # (B, D, Tp)
        slab = (xp.reshape(G, tb, D, Tp).transpose(0, 2, 1, 3)
                  .reshape(G, D, Wt))
        slab = jnp.pad(slab, ((0, 0), (0, 0), (0, We - Wt)))             # (G, D, We)
        taps = [slab[:, :, k:k + Wh] for k in range(K1)]
        ones = jnp.ones((G, 1, Wh), dtype=xs.dtype)
        return jnp.concatenate(taps + [ones], axis=1)                    # (G, K1*D+1, Wh)

    def residual_slab(xs):
        # (B, Th, D) -> (G, D, Wt); valid at positions t < Th of each segment.
        xc = jnp.transpose(xs, (0, 2, 1))                                # (B, D, Th)
        xc = jnp.pad(xc, ((0, 0), (0, 0), (0, Tp - Th)))                 # (B, D, Tp)
        return xc.reshape(G, tb, D, Tp).transpose(0, 2, 1, 3).reshape(G, D, Wt)

    def from_slab(y):
        # (G, D, Wt) -> (B, Th, D): drop the per-segment scratch columns.
        y = y.reshape(G, D, tb, Tp)[:, :, :, :Th]                        # (G, D, tb, Th)
        return jnp.transpose(y, (0, 2, 3, 1)).reshape(B, Th, D)

    def conv1_weight(w1, b1):
        wf = jnp.transpose(w1, (0, 2, 1)).reshape(H, K1 * D)             # row = k*D + d
        return jnp.concatenate([wf, b1[:, None]], axis=1)                # bias column

    def conv2_weight(w2):
        return jnp.transpose(w2, (0, 2, 1)).reshape(D, K2 * H)           # row = k*H + h

    cols_odd = im2col_conv1(x_odd)          # feeds phi
    cols_even = im2col_conv1(x_even)        # feeds psi
    res_even = residual_slab(x_even)
    res_odd = residual_slab(x_odd)
    w1p = conv1_weight(w1_phi, b1_phi); w2p = conv2_weight(w2_phi); b2p = b2_phi[:, None]
    w1s = conv1_weight(w1_psi, b1_psi); w2s = conv2_weight(w2_psi); b2s = b2_psi[:, None]

    # ------------------------------ kernel ---------------------------------
    def kernel(c1o_ref, c1e_ref, re_ref, ro_ref,
               w1p_ref, w2p_ref, b2p_ref, w1s_ref, w2s_ref, b2s_ref,
               oe_ref, oo_ref):
        def branch(cols1, w1aug, w2flat, b2col):
            # conv1 (k=K1) + bias: one fused MXU matmul over the im2col slab.
            h = jnp.dot(w1aug, cols1, preferred_element_type=jnp.float32)   # (H, Wh)
            h = jnp.maximum(h, 0.01 * h)                                    # LeakyReLU(0.01)
            # TODO(synk): nn.Dropout is stochastic in train mode; identity here.
            # conv2 (k=K2): im2col built in VMEM from h (K2 lane-shifted,
            # sublane-aligned slices), then one (D, K2*H) matmul; bias added
            # as a lane-broadcast.
            cols2 = jnp.concatenate([h[:, k:k + Wt] for k in range(K2)], axis=0)
            y = jnp.dot(w2flat, cols2, preferred_element_type=jnp.float32) + b2col
            return jnp.tanh(y)                                              # (D, Wt)

        phi = branch(c1o_ref[0], w1p_ref[...], w2p_ref[...], b2p_ref[...])
        psi = branch(c1e_ref[0], w1s_ref[...], w2s_ref[...], b2s_ref[...])
        oe_ref[0] = (re_ref[0] + phi).astype(oe_ref.dtype)   # x_even + phi(x_odd)
        oo_ref[0] = (ro_ref[0] + psi).astype(oo_ref.dtype)   # x_odd  + psi(x_even)

    tile_specs = [
        pl.BlockSpec((1, K1 * D + 1, Wh), lambda g: (g, 0, 0)),
        pl.BlockSpec((1, K1 * D + 1, Wh), lambda g: (g, 0, 0)),
        pl.BlockSpec((1, D, Wt), lambda g: (g, 0, 0)),
        pl.BlockSpec((1, D, Wt), lambda g: (g, 0, 0)),
    ]
    weight_specs = [
        pl.BlockSpec((H, K1 * D + 1), lambda g: (0, 0)),
        pl.BlockSpec((D, K2 * H), lambda g: (0, 0)),
        pl.BlockSpec((D, 1), lambda g: (0, 0)),
        pl.BlockSpec((H, K1 * D + 1), lambda g: (0, 0)),
        pl.BlockSpec((D, K2 * H), lambda g: (0, 0)),
        pl.BlockSpec((D, 1), lambda g: (0, 0)),
    ]
    out_specs = [
        pl.BlockSpec((1, D, Wt), lambda g: (g, 0, 0)),
        pl.BlockSpec((1, D, Wt), lambda g: (g, 0, 0)),
    ]

    oe, oo = pl.pallas_call(
        kernel,
        out_shape=(jax.ShapeDtypeStruct((G, D, Wt), x.dtype),
                   jax.ShapeDtypeStruct((G, D, Wt), x.dtype)),
        grid_spec=pltpu.PrefetchScalarGridSpec(
            num_scalar_prefetch=0,
            grid=(G,),
            in_specs=tile_specs + weight_specs,
            out_specs=out_specs,
        ),
        compiler_params=pltpu.CompilerParams(
            dimension_semantics=("parallel",)),
    )(cols_odd, cols_even, res_even, res_odd, w1p, w2p, b2p, w1s, w2s, b2s)

    return from_slab(oe), from_slab(oo)


# ------------------------- pure-JAX reference -------------------------------
def level_scinet_reference(x, w1_phi, b1_phi, w2_phi, b2_phi,
                           w1_psi, b1_psi, w2_psi, b2_psi):
    K1 = w1_phi.shape[2]
    pad_l, pad_r = _interactor_pads(K1)
    x_even = jnp.transpose(x[:, 0::2, :], (0, 2, 1))    # (B, D, Th)
    x_odd = jnp.transpose(x[:, 1::2, :], (0, 2, 1))

    def conv1d(z, w, b):   # z: (B, C, L), w: (O, C, K) — cross-correlation, VALID
        K = w.shape[2]
        Lo = z.shape[2] - K + 1
        y = sum(jnp.einsum('oc,bcl->bol', w[:, :, k], z[:, :, k:k + Lo])
                for k in range(K))
        return y + b[None, :, None]

    def branch(z, w1, b1, w2, b2):
        z = jnp.pad(z, ((0, 0), (0, 0), (pad_l, pad_r)), mode='edge')
        z = conv1d(z, w1, b1)
        z = jnp.where(z >= 0, z, 0.01 * z)               # LeakyReLU(0.01)
        z = conv1d(z, w2, b2)                            # Dropout = identity (eval)
        return jnp.tanh(z)

    even_up = x_even + branch(x_odd, w1_phi, b1_phi, w2_phi, b2_phi)
    odd_up = x_odd + branch(x_even, w1_psi, b1_psi, w2_psi, b2_psi)
    return jnp.transpose(even_up, (0, 2, 1)), jnp.transpose(odd_up, (0, 2, 1))


if __name__ == "__main__":
    key = jax.random.PRNGKey(0)
    ks = jax.random.split(key, 10)

    # Small shapes consistent with LevelSCINet: batch=2, seq=16, in_planes=4,
    # hidden_size=8 -> hidden channels H = 32, kernel=5, groups=1.
    B, T, D, hidden_size = 2, 16, 4, 8
    H = D * hidden_size
    K1, K2 = 5, 3

    x = jax.random.normal(ks[0], (B, T, D), dtype=jnp.float32)

    def conv_w(k, shape):
        fan_in = shape[1] * shape[2]
        bound = 1.0 / (fan_in ** 0.5)
        return jax.random.uniform(k, shape, minval=-bound, maxval=bound,
                                  dtype=jnp.float32)

    w1_phi = conv_w(ks[1], (H, D, K1))
    b1_phi = 0.1 * jax.random.normal(ks[2], (H,), dtype=jnp.float32)
    w2_phi = conv_w(ks[3], (D, H, K2))
    b2_phi = 0.1 * jax.random.normal(ks[4], (D,), dtype=jnp.float32)
    w1_psi = conv_w(ks[5], (H, D, K1))
    b1_psi = 0.1 * jax.random.normal(ks[6], (H,), dtype=jnp.float32)
    w2_psi = conv_w(ks[7], (D, H, K2))
    b2_psi = 0.1 * jax.random.normal(ks[8], (D,), dtype=jnp.float32)

    out_even, out_odd = level_scinet_forward(
        x, w1_phi, b1_phi, w2_phi, b2_phi, w1_psi, b1_psi, w2_psi, b2_psi)
    out_even = jax.block_until_ready(out_even)
    out_odd = jax.block_until_ready(out_odd)

    ref_even, ref_odd = level_scinet_reference(
        x, w1_phi, b1_phi, w2_phi, b2_phi, w1_psi, b1_psi, w2_psi, b2_psi)

    assert out_even.shape == (B, T // 2, D) and out_odd.shape == (B, T // 2, D)
    assert jnp.allclose(out_even, ref_even, atol=1e-4, rtol=1e-4), "even mismatch"
    assert jnp.allclose(out_odd, ref_odd, atol=1e-4, rtol=1e-4), "odd mismatch"

    print("KERNEL_OK")
</pallas_src>

<mosaic_0001>
module attributes {stable_mosaic.version = 11 : i64} {
  func.func @kernel(%arg0: i32, %arg1: memref<1x21x30xf32, #tpu.memory_space<vmem>>, %arg2: memref<1x21x30xf32, #tpu.memory_space<vmem>>, %arg3: memref<1x4x28xf32, #tpu.memory_space<vmem>>, %arg4: memref<1x4x28xf32, #tpu.memory_space<vmem>>, %arg5: memref<32x21xf32, #tpu.memory_space<vmem>>, %arg6: memref<4x96xf32, #tpu.memory_space<vmem>>, %arg7: memref<4x1xf32, #tpu.memory_space<vmem>>, %arg8: memref<32x21xf32, #tpu.memory_space<vmem>>, %arg9: memref<4x96xf32, #tpu.memory_space<vmem>>, %arg10: memref<4x1xf32, #tpu.memory_space<vmem>>, %arg11: memref<1x4x28xf32, #tpu.memory_space<vmem>>, %arg12: memref<1x4x28xf32, #tpu.memory_space<vmem>>) attributes {dimension_semantics = [#tpu.dimension_semantics<parallel>], iteration_bounds = array<i64: 1>, scalar_prefetch = 0 : i64, scratch_operands = 0 : i64, tpu.core_type = #tpu.core_type<tc>, window_params = [{transform_indices = @transform_0, window_bounds = array<i64: 1, 21, 30>}, {transform_indices = @transform_1, window_bounds = array<i64: 1, 21, 30>}, {transform_indices = @transform_2, window_bounds = array<i64: 1, 4, 28>}, {transform_indices = @transform_3, window_bounds = array<i64: 1, 4, 28>}, {pipeline_mode = #tpu.pipeline_mode<synchronous>, transform_indices = @transform_4, window_bounds = array<i64: 32, 21>}, {pipeline_mode = #tpu.pipeline_mode<synchronous>, transform_indices = @transform_5, window_bounds = array<i64: 4, 96>}, {pipeline_mode = #tpu.pipeline_mode<synchronous>, transform_indices = @transform_6, window_bounds = array<i64: 4, 1>}, {pipeline_mode = #tpu.pipeline_mode<synchronous>, transform_indices = @transform_7, window_bounds = array<i64: 32, 21>}, {pipeline_mode = #tpu.pipeline_mode<synchronous>, transform_indices = @transform_8, window_bounds = array<i64: 4, 96>}, {pipeline_mode = #tpu.pipeline_mode<synchronous>, transform_indices = @transform_9, window_bounds = array<i64: 4, 1>}, {transform_indices = @transform_10, window_bounds = array<i64: 1, 4, 28>}, {transform_indices = @transform_11, window_bounds = array<i64: 1, 4, 28>}]} {
    %c0 = arith.constant 0 : index
    %c0_0 = arith.constant 0 : index
    %c0_1 = arith.constant 0 : index
    %0 = vector.load %arg1[%c0, %c0_0, %c0_1] : memref<1x21x30xf32, #tpu.memory_space<vmem>>, vector<1x21x30xf32>
    %1 = vector.shape_cast %0 : vector<1x21x30xf32> to vector<21x30xf32>
    %c0_2 = arith.constant 0 : index
    %c0_3 = arith.constant 0 : index
    %2 = vector.load %arg5[%c0_2, %c0_3] : memref<32x21xf32, #tpu.memory_space<vmem>>, vector<32x21xf32>
    %c0_4 = arith.constant 0 : index
    %c0_5 = arith.constant 0 : index
    %3 = vector.load %arg6[%c0_4, %c0_5] : memref<4x96xf32, #tpu.memory_space<vmem>>, vector<4x96xf32>
    %c0_6 = arith.constant 0 : index
    %c0_7 = arith.constant 0 : index
    %4 = vector.load %arg7[%c0_6, %c0_7] : memref<4x1xf32, #tpu.memory_space<vmem>>, vector<4x1xf32>
    %cst = arith.constant dense<0.000000e+00> : vector<32x30xf32>
    %5 = tpu.matmul %2, %1, %cst {dimension_numbers = #tpu.dot_dimension_numbers<[1], [0], [0], [1], [0, 0, 1, 1], [], []>} : vector<32x21xf32>, vector<21x30xf32>, vector<32x30xf32> -> vector<32x30xf32>
    %cst_8 = arith.constant 0.00999999977 : f32
    %6 = vector.broadcast %cst_8 : f32 to vector<32x30xf32>
    %7 = arith.mulf %6, %5 : vector<32x30xf32>
    %8 = arith.maximumf %5, %7 : vector<32x30xf32>
    %9 = vector.extract_strided_slice %8 {offsets = [0, 0], sizes = [32, 28], strides = [1, 1]} : vector<32x30xf32> to vector<32x28xf32>
    %10 = vector.extract_strided_slice %8 {offsets = [0, 1], sizes = [32, 28], strides = [1, 1]} : vector<32x30xf32> to vector<32x28xf32>
    %11 = vector.extract_strided_slice %8 {offsets = [0, 2], sizes = [32, 28], strides = [1, 1]} : vector<32x30xf32> to vector<32x28xf32>
    %12 = tpu.concatenate %9, %10, %11 in 0 : vector<32x28xf32>, vector<32x28xf32>, vector<32x28xf32> -> vector<96x28xf32>
    %cst_9 = arith.constant dense<0.000000e+00> : vector<4x28xf32>
    %13 = tpu.matmul %3, %12, %cst_9 {dimension_numbers = #tpu.dot_dimension_numbers<[1], [0], [0], [1], [0, 0, 1, 1], [], []>} : vector<4x96xf32>, vector<96x28xf32>, vector<4x28xf32> -> vector<4x28xf32>
    %14 = vector.broadcast %4 : vector<4x1xf32> to vector<4x28xf32>
    %15 = arith.addf %13, %14 : vector<4x28xf32>
    %16 = math.tanh %15 : vector<4x28xf32>
    %c0_10 = arith.constant 0 : index
    %c0_11 = arith.constant 0 : index
    %c0_12 = arith.constant 0 : index
    %17 = vector.load %arg2[%c0_10, %c0_11, %c0_12] : memref<1x21x30xf32, #tpu.memory_space<vmem>>, vector<1x21x30xf32>
    %18 = vector.shape_cast %17 : vector<1x21x30xf32> to vector<21x30xf32>
    %c0_13 = arith.constant 0 : index
    %c0_14 = arith.constant 0 : index
    %19 = vector.load %arg8[%c0_13, %c0_14] : memref<32x21xf32, #tpu.memory_space<vmem>>, vector<32x21xf32>
    %c0_15 = arith.constant 0 : index
    %c0_16 = arith.constant 0 : index
    %20 = vector.load %arg9[%c0_15, %c0_16] : memref<4x96xf32, #tpu.memory_space<vmem>>, vector<4x96xf32>
    %c0_17 = arith.constant 0 : index
    %c0_18 = arith.constant 0 : index
    %21 = vector.load %arg10[%c0_17, %c0_18] : memref<4x1xf32, #tpu.memory_space<vmem>>, vector<4x1xf32>
    %cst_19 = arith.constant dense<0.000000e+00> : vector<32x30xf32>
    %22 = tpu.matmul %19, %18, %cst_19 {dimension_numbers = #tpu.dot_dimension_numbers<[1], [0], [0], [1], [0, 0, 1, 1], [], []>} : vector<32x21xf32>, vector<21x30xf32>, vector<32x30xf32> -> vector<32x30xf32>
    %cst_20 = arith.constant 0.00999999977 : f32
    %23 = vector.broadcast %cst_20 : f32 to vector<32x30xf32>
    %24 = arith.mulf %23, %22 : vector<32x30xf32>
    %25 = arith.maximumf %22, %24 : vector<32x30xf32>
    %26 = vector.extract_strided_slice %25 {offsets = [0, 0], sizes = [32, 28], strides = [1, 1]} : vector<32x30xf32> to vector<32x28xf32>
    %27 = vector.extract_strided_slice %25 {offsets = [0, 1], sizes = [32, 28], strides = [1, 1]} : vector<32x30xf32> to vector<32x28xf32>
    %28 = vector.extract_strided_slice %25 {offsets = [0, 2], sizes = [32, 28], strides = [1, 1]} : vector<32x30xf32> to vector<32x28xf32>
    %29 = tpu.concatenate %26, %27, %28 in 0 : vector<32x28xf32>, vector<32x28xf32>, vector<32x28xf32> -> vector<96x28xf32>
    %cst_21 = arith.constant dense<0.000000e+00> : vector<4x28xf32>
    %30 = tpu.matmul %20, %29, %cst_21 {dimension_numbers = #tpu.dot_dimension_numbers<[1], [0], [0], [1], [0, 0, 1, 1], [], []>} : vector<4x96xf32>, vector<96x28xf32>, vector<4x28xf32> -> vector<4x28xf32>
    %31 = vector.broadcast %21 : vector<4x1xf32> to vector<4x28xf32>
    %32 = arith.addf %30, %31 : vector<4x28xf32>
    %33 = math.tanh %32 : vector<4x28xf32>
    %c0_22 = arith.constant 0 : index
    %c0_23 = arith.constant 0 : index
    %c0_24 = arith.constant 0 : index
    %34 = vector.load %arg3[%c0_22, %c0_23, %c0_24] : memref<1x4x28xf32, #tpu.memory_space<vmem>>, vector<1x4x28xf32>
    %35 = vector.shape_cast %34 : vector<1x4x28xf32> to vector<4x28xf32>
    %36 = arith.addf %35, %16 : vector<4x28xf32>
    %c0_25 = arith.constant 0 : index
    %c0_26 = arith.constant 0 : index
    %c0_27 = arith.constant 0 : index
    %37 = vector.load %arg11[%c0_25, %c0_26, %c0_27] : memref<1x4x28xf32, #tpu.memory_space<vmem>>, vector<1x4x28xf32>
    %38 = vector.shape_cast %37 : vector<1x4x28xf32> to vector<4x28xf32>
    %39 = vector.shape_cast %36 : vector<4x28xf32> to vector<1x4x28xf32>
    tpu.vector_store %arg11[%c0_25, %c0_26, %c0_27], %39 {strides = array<i32>} : memref<1x4x28xf32, #tpu.memory_space<vmem>>, vector<1x4x28xf32>,
    %c0_28 = arith.constant 0 : index
    %c0_29 = arith.constant 0 : index
    %c0_30 = arith.constant 0 : index
    %40 = vector.load %arg4[%c0_28, %c0_29, %c0_30] : memref<1x4x28xf32, #tpu.memory_space<vmem>>, vector<1x4x28xf32>
    %41 = vector.shape_cast %40 : vector<1x4x28xf32> to vector<4x28xf32>
    %42 = arith.addf %41, %33 : vector<4x28xf32>
    %c0_31 = arith.constant 0 : index
    %c0_32 = arith.constant 0 : index
    %c0_33 = arith.constant 0 : index
    %43 = vector.load %arg12[%c0_31, %c0_32, %c0_33] : memref<1x4x28xf32, #tpu.memory_space<vmem>>, vector<1x4x28xf32>
    %44 = vector.shape_cast %43 : vector<1x4x28xf32> to vector<4x28xf32>
    %45 = vector.shape_cast %42 : vector<4x28xf32> to vector<1x4x28xf32>
    tpu.vector_store %arg12[%c0_31, %c0_32, %c0_33], %45 {strides = array<i32>} : memref<1x4x28xf32, #tpu.memory_space<vmem>>, vector<1x4x28xf32>,
    return
  }
  func.func @transform_0(%arg0: i32) -> (i32, i32, i32) {
    %c0_i32 = arith.constant 0 : i32
    %c0_i32_0 = arith.constant 0 : i32
    %c0_i32_1 = arith.constant 0 : i32
    return %arg0, %c0_i32, %c0_i32_0 : i32, i32, i32
  }
  func.func @transform_1(%arg0: i32) -> (i32, i32, i32) {
    %c0_i32 = arith.constant 0 : i32
    %c0_i32_0 = arith.constant 0 : i32
    %c0_i32_1 = arith.constant 0 : i32
    return %arg0, %c0_i32, %c0_i32_0 : i32, i32, i32
  }
  func.func @transform_2(%arg0: i32) -> (i32, i32, i32) {
    %c0_i32 = arith.constant 0 : i32
    %c0_i32_0 = arith.constant 0 : i32
    %c0_i32_1 = arith.constant 0 : i32
    return %arg0, %c0_i32, %c0_i32_0 : i32, i32, i32
  }
  func.func @transform_3(%arg0: i32) -> (i32, i32, i32) {
    %c0_i32 = arith.constant 0 : i32
    %c0_i32_0 = arith.constant 0 : i32
    %c0_i32_1 = arith.constant 0 : i32
    return %arg0, %c0_i32, %c0_i32_0 : i32, i32, i32
  }
  func.func @transform_4(%arg0: i32) -> (i32, i32) {
    %c0_i32 = arith.constant 0 : i32
    %c0_i32_0 = arith.constant 0 : i32
    %c0_i32_1 = arith.constant 0 : i32
    return %c0_i32, %c0_i32_0 : i32, i32
  }
  func.func @transform_5(%arg0: i32) -> (i32, i32) {
    %c0_i32 = arith.constant 0 : i32
    %c0_i32_0 = arith.constant 0 : i32
    %c0_i32_1 = arith.constant 0 : i32
    return %c0_i32, %c0_i32_0 : i32, i32
  }
  func.func @transform_6(%arg0: i32) -> (i32, i32) {
    %c0_i32 = arith.constant 0 : i32
    %c0_i32_0 = arith.constant 0 : i32
    %c0_i32_1 = arith.constant 0 : i32
    return %c0_i32, %c0_i32_0 : i32, i32
  }
  func.func @transform_7(%arg0: i32) -> (i32, i32) {
    %c0_i32 = arith.constant 0 : i32
    %c0_i32_0 = arith.constant 0 : i32
    %c0_i32_1 = arith.constant 0 : i32
    return %c0_i32, %c0_i32_0 : i32, i32
  }
  func.func @transform_8(%arg0: i32) -> (i32, i32) {
    %c0_i32 = arith.constant 0 : i32
    %c0_i32_0 = arith.constant 0 : i32
    %c0_i32_1 = arith.constant 0 : i32
    return %c0_i32, %c0_i32_0 : i32, i32
  }
  func.func @transform_9(%arg0: i32) -> (i32, i32) {
    %c0_i32 = arith.constant 0 : i32
    %c0_i32_0 = arith.constant 0 : i32
    %c0_i32_1 = arith.constant 0 : i32
    return %c0_i32, %c0_i32_0 : i32, i32
  }
  func.func @transform_10(%arg0: i32) -> (i32, i32, i32) {
    %c0_i32 = arith.constant 0 : i32
    %c0_i32_0 = arith.constant 0 : i32
    %c0_i32_1 = arith.constant 0 : i32
    return %arg0, %c0_i32, %c0_i32_0 : i32, i32, i32
  }
  func.func @transform_11(%arg0: i32) -> (i32, i32, i32) {
    %c0_i32 = arith.constant 0 : i32
    %c0_i32_0 = arith.constant 0 : i32
    %c0_i32_1 = arith.constant 0 : i32
    return %arg0, %c0_i32, %c0_i32_0 : i32, i32, i32
  }
}

</mosaic_0001>

<llo_original>
// kernel: tpu_custom_call.1
$region0: #{tpu_custom_call.1}
  #allocation0 [shape = 'u32[]', space=smem, size = 0x4, offset = 0x4, fixed_abs, tag = 'smem constant byte address 0x4 - core index']
  #allocation1 [shape = 'u32[72,128]{1,0:T(1,128)}', space=vmem, size = 0x9000, scoped, tag = 'internal scratch']
  %s0 = inlined_call_operand.vmem [shape: f32[1,21,30], index: 0, kind: input, shape index: {}]
  %s1 = inlined_call_operand.vmem [shape: f32[1,21,30], index: 1, kind: input, shape index: {}]
  %s2 = inlined_call_operand.vmem [shape: f32[1,4,28], index: 2, kind: input, shape index: {}]
  %s3 = inlined_call_operand.vmem [shape: f32[1,4,28], index: 3, kind: input, shape index: {}]
  %s4 = inlined_call_operand.vmem [shape: f32[32,21], index: 4, kind: input, shape index: {}]
  %s5 = inlined_call_operand.vmem [shape: f32[4,96], index: 5, kind: input, shape index: {}]
  %s6 = inlined_call_operand.vmem [shape: f32[4,1], index: 6, kind: input, shape index: {}]
  %s7 = inlined_call_operand.vmem [shape: f32[32,21], index: 7, kind: input, shape index: {}]
  %s8 = inlined_call_operand.vmem [shape: f32[4,96], index: 8, kind: input, shape index: {}]
  %s9 = inlined_call_operand.vmem [shape: f32[4,1], index: 9, kind: input, shape index: {}]
  %s10 = inlined_call_operand.hbm [shape: f32[1,4,28], index: 10, kind: output, shape index: {0}]
  %s11 = inlined_call_operand.hbm [shape: f32[1,4,28], index: 11, kind: output, shape index: {1}]
  %12 = xla_tuple %s10, %s11
  %s13 = sld [smem:[#allocation0]]
  $region58: #{tpu_custom_call.1} parent=0
    _
  %s15 = ssub.s32 1, %s13
  %s16 = scalar_select 0, %s15, %s13
  $region1: #{tpu_custom_call.1} parent=0
    #allocation2 [shape = 'u8[2048]{0}', space=vmem, size = 0x800, scoped, tag = 'output window, operand 0, single buffered']
    #allocation3 [shape = 's32[1]{0}', space=sflag, size = 0x4, scoped, tag = 'scoped memory for tpu_custom_call.1']
    #allocation4 [shape = 'u8[2048]{0}', space=vmem, size = 0x800, scoped, tag = 'output window, operand 1, single buffered']
    #allocation5 [shape = 's32[1]{0}', space=sflag, size = 0x4, scoped, tag = 'scoped memory for tpu_custom_call.1']
    %17 = vsyncpa [#allocation3], 0
    %18 = vsyncpa [#allocation5], 0
    // Predicated region
    $region2: #{tpu_custom_call.1} parent=1 // pred_check
      _
    $region3: #{tpu_custom_call.1} parent=1 // pred_check_branch
      %20 = sbr.rel (0) target = $region5
    $region4: #{tpu_custom_call.1} parent=1 // pred_region
      _
    $region5: #{tpu_custom_call.1} parent=1 // pred_fallthru
      _
    // Predicated region
    $region6: #{tpu_custom_call.1} parent=1 // pred_check
      _
    $region7: #{tpu_custom_call.1} parent=1 // pred_check_branch
      %22 = sbr.rel (0) target = $region9
    $region8: #{tpu_custom_call.1} parent=1 // pred_region
      _
    $region9: #{tpu_custom_call.1} parent=1 // pred_fallthru
      _
    // Predicated region
    $region10: #{tpu_custom_call.1} parent=1 // pred_check
      _
    $region11: #{tpu_custom_call.1} parent=1 // pred_check_branch
      %24 = sbr.rel (0) target = $region13
    $region12: #{tpu_custom_call.1} parent=1 // pred_region
      _
    $region13: #{tpu_custom_call.1} parent=1 // pred_fallthru
      _
    // Predicated region
    $region14: #{tpu_custom_call.1} parent=1 // pred_check
      _
    $region15: #{tpu_custom_call.1} parent=1 // pred_check_branch
      %26 = sbr.rel (0) target = $region17
    $region16: #{tpu_custom_call.1} parent=1 // pred_region
      _
    $region17: #{tpu_custom_call.1} parent=1 // pred_fallthru
      _
    // Predicated region
    $region18: #{tpu_custom_call.1} parent=1 // pred_check
      _
    $region19: #{tpu_custom_call.1} parent=1 // pred_check_branch
      %28 = sbr.rel (0) target = $region21
    $region20: #{tpu_custom_call.1} parent=1 // pred_region
      _
    $region21: #{tpu_custom_call.1} parent=1 // pred_fallthru
      _
    // Predicated region
    $region22: #{tpu_custom_call.1} parent=1 // pred_check
      _
    $region23: #{tpu_custom_call.1} parent=1 // pred_check_branch
      %30 = sbr.rel (0) target = $region25
    $region24: #{tpu_custom_call.1} parent=1 // pred_region
      _
    $region25: #{tpu_custom_call.1} parent=1 // pred_fallthru
      _
    // Predicated region
    $region26: #{tpu_custom_call.1} parent=1 // pred_check
      _
    $region27: #{tpu_custom_call.1} parent=1 // pred_check_branch
      %32 = sbr.rel (0) target = $region29
    $region28: #{tpu_custom_call.1} parent=1 // pred_region
      _
    $region29: #{tpu_custom_call.1} parent=1 // pred_fallthru
      _
    // Predicated region
    $region30: #{tpu_custom_call.1} parent=1 // pred_check
      _
    $region31: #{tpu_custom_call.1} parent=1 // pred_check_branch
      %34 = sbr.rel (0) target = $region33
    $region32: #{tpu_custom_call.1} parent=1 // pred_region
      _
    $region33: #{tpu_custom_call.1} parent=1 // pred_fallthru
      _
    // Predicated region
    $region34: #{tpu_custom_call.1} parent=1 // pred_check
      _
    $region35: #{tpu_custom_call.1} parent=1 // pred_check_branch
      %36 = sbr.rel (0) target = $region37
    $region36: #{tpu_custom_call.1} parent=1 // pred_region
      _
    $region37: #{tpu_custom_call.1} parent=1 // pred_fallthru
      _
    // Predicated region
    $region38: #{tpu_custom_call.1} parent=1 // pred_check
      _
    $region39: #{tpu_custom_call.1} parent=1 // pred_check_branch
      %38 = sbr.rel (0) target = $region41
    $region40: #{tpu_custom_call.1} parent=1 // pred_region
      _
    $region41: #{tpu_custom_call.1} parent=1 // pred_fallthru
      _
    %v39 = vld [vmem:[%s0] sm:$0xff]
    %v40 = vld [vmem:[%s0 + $0x8] sm:$0xff]
    %v41 = vld [vmem:[%s0 + $0x10] sm:$0x1f]
    %v42 = vld [vmem:[%s4] sm:$0xff]
    %v43 = vld [vmem:[%s4 + $0x8] sm:$0xff]
    %v44 = vld [vmem:[%s4 + $0x10] sm:$0xff]
    %v45 = vld [vmem:[%s4 + $0x18] sm:$0xff]
    %v46 = vld [vmem:[%s5] sm:$0xf]
    %v47 = vld [vmem:[%s6] sm:$0xf]
    %vm48 = vcmask 171008
    %v50 = vsel %vm48, %v42, 0
    %v53 = vsel %vm48, %v43, 0
    %v56 = vsel %vm48, %v44, 0
    %v59 = vsel %vm48, %v45, 0
    %vm61 = vcmask 1044480
    %v63 = vsel %vm61, %v41, 0
    %65 = vmatpush.msra.mxu0 0.0
    %66 = vmatpush.msra.mxu0 0.0
    %67 = vmatpush.msra.mxu0 0.0
    %68 = vmatpush.msra.mxu0 0.0
    %69 = vmatpush.msra.mxu0 0.0
    %70 = vmatpush.msra.mxu0 0.0
    %71 = vmatpush.msra.mxu0 0.0
    %72 = vmatpush.msra.mxu0 0.0
    %73 = vmatpush.msra.mxu0 0.0
    %74 = vmatpush.msra.mxu0 0.0
    %75 = vmatpush.msra.mxu0 0.0
    %76 = vmatpush.msra.mxu0 0.0
    %77 = vmatpush.msra.mxu0 0.0
    %78 = vmatpush.msra.mxu0 %v63
    %79 = vmatpush.msra.mxu0 %v40
    %80 = vmatpush.msra.mxu0 %v39
    %81 = vmatmul.f32.gmra.mxu0 %v50
    %v82 = vpop.f32.mrf.mxu0
    %v83 = vadd.f32 0.0, %v82
    %84 = vmatmul.f32.gmra.mxu0 %v53
    %v85 = vpop.f32.mrf.mxu0
    %v86 = vadd.f32 0.0, %v85
    %87 = vmatmul.f32.gmra.mxu0 %v56
    %v88 = vpop.f32.mrf.mxu0
    %v89 = vadd.f32 0.0, %v88
    %90 = vmatmul.f32.gmra.mxu0 %v59
    %v91 = vpop.f32.mrf.mxu0
    %v92 = vadd.f32 0.0, %v91
    %93 = vdwg.mxu0
    %v94 = vmul.f32 %v83, 0.01
    %v95 = vmul.f32 %v86, 0.01
    %v96 = vmul.f32 %v89, 0.01
    %v97 = vmul.f32 %v92, 0.01
    %v98 = vmax.f32 %v83, %v94
    %v99 = vmax.f32 %v86, %v95
    %v100 = vmax.f32 %v89, %v96
    %v101 = vmax.f32 %v92, %v97
    %106 = vrot.lane.b32.xlu0 %v98, 127
    %v107 = vpop.permute.xlu0 %106
    %108 = vrot.lane.b32.xlu0 %v99, 127
    %v109 = vpop.permute.xlu0 %108
    %110 = vrot.lane.b32.xlu0 %v100, 127
    %v111 = vpop.permute.xlu0 %110
    %112 = vrot.lane.b32.xlu0 %v101, 127
    %v113 = vpop.permute.xlu0 %112
    %118 = vrot.lane.b32.xlu0 %v98, 126
    %v119 = vpop.permute.xlu0 %118
    %120 = vrot.lane.b32.xlu0 %v99, 126
    %v121 = vpop.permute.xlu0 %120
    %122 = vrot.lane.b32.xlu0 %v100, 126
    %v123 = vpop.permute.xlu0 %122
    %124 = vrot.lane.b32.xlu0 %v101, 126
    %v125 = vpop.permute.xlu0 %124
    %131 = vset.pattern.permute.xlu0 0
    %132 = vperm.xlu0 %131, %v47
    %v133 = vpop.permute.xlu0 %132
    %vm135 = vcmask 785408
    %v137 = vsel %vm135, %v46, 0
    %139 = vmatpush.msra.mxu0 0.0
    %140 = vmatpush.msra.mxu0 0.0
    %141 = vmatpush.msra.mxu0 0.0
    %142 = vmatpush.msra.mxu0 0.0
    %143 = vmatpush.msra.mxu0 %v125
    %144 = vmatpush.msra.mxu0 %v123
    %145 = vmatpush.msra.mxu0 %v121
    %146 = vmatpush.msra.mxu0 %v119
    %147 = vmatpush.msra.mxu0 %v113
    %148 = vmatpush.msra.mxu0 %v111
    %149 = vmatpush.msra.mxu0 %v109
    %150 = vmatpush.msra.mxu0 %v107
    %151 = vmatpush.msra.mxu0 %v101
    %152 = vmatpush.msra.mxu0 %v100
    %153 = vmatpush.msra.mxu0 %v99
    %154 = vmatpush.msra.mxu0 %v98
    %155 = vmatmul.f32.gmra.mxu0 %v137
    %v156 = vpop.f32.mrf.mxu0
    %v157 = vadd.f32 %v133, %v156
    %158 = vdwg.mxu0
    %v159 = vtanh.pop %v157
    %v160 = vld [vmem:[%s1] sm:$0xff]
    %v161 = vld [vmem:[%s1 + $0x8] sm:$0xff]
    %v162 = vld [vmem:[%s1 + $0x10] sm:$0x1f]
    %v163 = vld [vmem:[%s7] sm:$0xff]
    %v164 = vld [vmem:[%s7 + $0x8] sm:$0xff]
    %v165 = vld [vmem:[%s7 + $0x10] sm:$0xff]
    %v166 = vld [vmem:[%s7 + $0x18] sm:$0xff]
    %v167 = vld [vmem:[%s8] sm:$0xf]
    %v168 = vld [vmem:[%s9] sm:$0xf]
    %v170 = vsel %vm48, %v163, 0
    %v173 = vsel %vm48, %v164, 0
    %v176 = vsel %vm48, %v165, 0
    %v179 = vsel %vm48, %v166, 0
    %v182 = vsel %vm61, %v162, 0
    %184 = vmatpush.msra.mxu0 0.0
    %185 = vmatpush.msra.mxu0 0.0
    %186 = vmatpush.msra.mxu0 0.0
    %187 = vmatpush.msra.mxu0 0.0
    %188 = vmatpush.msra.mxu0 0.0
    %189 = vmatpush.msra.mxu0 0.0
    %190 = vmatpush.msra.mxu0 0.0
    %191 = vmatpush.msra.mxu0 0.0
    %192 = vmatpush.msra.mxu0 0.0
    %193 = vmatpush.msra.mxu0 0.0
    %194 = vmatpush.msra.mxu0 0.0
    %195 = vmatpush.msra.mxu0 0.0
    %196 = vmatpush.msra.mxu0 0.0
    %197 = vmatpush.msra.mxu0 %v182
    %198 = vmatpush.msra.mxu0 %v161
    %199 = vmatpush.msra.mxu0 %v160
    %200 = vmatmul.f32.gmra.mxu0 %v170
    %v201 = vpop.f32.mrf.mxu0
    %v202 = vadd.f32 0.0, %v201
    %203 = vmatmul.f32.gmra.mxu0 %v173
    %v204 = vpop.f32.mrf.mxu0
    %v205 = vadd.f32 0.0, %v204
    %206 = vmatmul.f32.gmra.mxu0 %v176
    %v207 = vpop.f32.mrf.mxu0
    %v208 = vadd.f32 0.0, %v207
    %209 = vmatmul.f32.gmra.mxu0 %v179
    %v210 = vpop.f32.mrf.mxu0
    %v211 = vadd.f32 0.0, %v210
    %212 = vdwg.mxu0
    %v213 = vmul.f32 %v202, 0.01
    %v214 = vmul.f32 %v205, 0.01
    %v215 = vmul.f32 %v208, 0.01
    %v216 = vmul.f32 %v211, 0.01
    %v217 = vmax.f32 %v202, %v213
    %v218 = vmax.f32 %v205, %v214
    %v219 = vmax.f32 %v208, %v215
    %v220 = vmax.f32 %v211, %v216
    %225 = vrot.lane.b32.xlu0 %v217, 127
    %v226 = vpop.permute.xlu0 %225
    %227 = vrot.lane.b32.xlu0 %v218, 127
    %v228 = vpop.permute.xlu0 %227
    %229 = vrot.lane.b32.xlu0 %v219, 127
    %v230 = vpop.permute.xlu0 %229
    %231 = vrot.lane.b32.xlu0 %v220, 127
    %v232 = vpop.permute.xlu0 %231
    %237 = vrot.lane.b32.xlu0 %v217, 126
    %v238 = vpop.permute.xlu0 %237
    %239 = vrot.lane.b32.xlu0 %v218, 126
    %v240 = vpop.permute.xlu0 %239
    %241 = vrot.lane.b32.xlu0 %v219, 126
    %v242 = vpop.permute.xlu0 %241
    %243 = vrot.lane.b32.xlu0 %v220, 126
    %v244 = vpop.permute.xlu0 %243
    %250 = vset.pattern.permute.xlu0 0
    %251 = vperm.xlu0 %250, %v168
    %v252 = vpop.permute.xlu0 %251
    %v255 = vsel %vm135, %v167, 0
    %257 = vmatpush.msra.mxu0 0.0
    %258 = vmatpush.msra.mxu0 0.0
    %259 = vmatpush.msra.mxu0 0.0
    %260 = vmatpush.msra.mxu0 0.0
    %261 = vmatpush.msra.mxu0 %v244
    %262 = vmatpush.msra.mxu0 %v242
    %263 = vmatpush.msra.mxu0 %v240
    %264 = vmatpush.msra.mxu0 %v238
    %265 = vmatpush.msra.mxu0 %v232
    %266 = vmatpush.msra.mxu0 %v230
    %267 = vmatpush.msra.mxu0 %v228
    %268 = vmatpush.msra.mxu0 %v226
    %269 = vmatpush.msra.mxu0 %v220
    %270 = vmatpush.msra.mxu0 %v219
    %271 = vmatpush.msra.mxu0 %v218
    %272 = vmatpush.msra.mxu0 %v217
    %273 = vmatmul.f32.gmra.mxu0 %v255
    %v274 = vpop.f32.mrf.mxu0
    %v275 = vadd.f32 %v252, %v274
    %276 = vdwg.mxu0
    %v277 = vtanh.pop %v275
    %v278 = vld [vmem:[%s2] sm:$0xf]
    %v279 = vadd.f32 %v278, %v159
    %vm280 = vcmask 224256
    %281 = vst.msk [vmem:[#allocation2] sm:$0xf] %vm280, %v279
    %v282 = vld [vmem:[%s3] sm:$0xf]
    %v283 = vadd.f32 %v282, %v277
    %284 = vst.msk [vmem:[#allocation4] sm:$0xf] %vm280, %v283
    // Predicated region
    $region42: #{tpu_custom_call.1} parent=1 // pred_check
      _
    $region43: #{tpu_custom_call.1} parent=1 // pred_check_branch
      %286 = sbr.rel (0) target = $region45
    $region44: #{tpu_custom_call.1} parent=1 // pred_region
      %288 = vsyncadd [#allocation3], 0
      %s290 = sshll.u32 [#allocation2], 4
      %s291 = int_to_ptr.vmem [resolvable:$true] %s290
      %s292 = sshll.u32 %s10, 4
      %s293 = int_to_ptr.hbm [resolvable:$true] %s292
      %295 = dma.vmem_to_hbm [thread:$0]  %s291, 64, %s293, [#allocation3]
    $region45: #{tpu_custom_call.1} parent=1 // pred_fallthru
      _
    // Predicated region
    $region46: #{tpu_custom_call.1} parent=1 // pred_check
      _
    $region47: #{tpu_custom_call.1} parent=1 // pred_check_branch
      %297 = sbr.rel (0) target = $region49
    $region48: #{tpu_custom_call.1} parent=1 // pred_region
      %299 = vsyncadd [#allocation5], 0
      %s301 = sshll.u32 [#allocation4], 4
      %s302 = int_to_ptr.vmem [resolvable:$true] %s301
      %s303 = sshll.u32 %s11, 4
      %s304 = int_to_ptr.hbm [resolvable:$true] %s303
      %306 = dma.vmem_to_hbm [thread:$0]  %s302, 64, %s304, [#allocation5]
    $region49: #{tpu_custom_call.1} parent=1 // pred_fallthru
      _
    // Predicated region
    $region50: #{tpu_custom_call.1} parent=1 // pred_check
      _
    $region51: #{tpu_custom_call.1} parent=1 // pred_check_branch
      %308 = sbr.rel (0) target = $region53
    $region52: #{tpu_custom_call.1} parent=1 // pred_region
      %310 = dma.done [#allocation3], 64
    $region53: #{tpu_custom_call.1} parent=1 // pred_fallthru
      _
    // Predicated region
    $region54: #{tpu_custom_call.1} parent=1 // pred_check
      _
    $region55: #{tpu_custom_call.1} parent=1 // pred_check_branch
      %312 = sbr.rel (0) target = $region57
    $region56: #{tpu_custom_call.1} parent=1 // pred_region
      %314 = dma.done [#allocation5], 64
    $region57: #{tpu_custom_call.1} parent=1 // pred_fallthru
      _
    %315 = vsyncpa [#allocation3], 1
    %316 = vsyncpa [#allocation5], 1

</llo_original>
